<compile_context>
chip_gen: v7x
topology: tpu7x:2x2x1
jax: 0.10.0
libtpu: 0.0.40
codegen_flags: <defaults>
</compile_context>

<pallas_src>
import functools

import jax
import jax.numpy as jnp
from jax.experimental import pallas as pl
from jax.experimental.pallas import tpu as pltpu


# -----------------------------------------------------------------------------
# Pallas kernel
# -----------------------------------------------------------------------------
def _loupe_kernel(params_ref, aw_ref, thresh_ref, out_ref,
                  *, sample_slope, sparsity, option):
    """Full LOUPE forward on one lane-dense (128, 128) float32 tile.

    params_ref : SMEM (2,) float32 -- [slope*conv_w, slope*conv_b]
    aw_ref     : VMEM (128, 128)   -- add_weight parameter (lane-dense view)
    thresh_ref : VMEM (128, 128)   -- U[0,1) thresholds (lane-dense view)
    out_ref    : VMEM (128, 128)   -- resulting mask
    """
    a_eff = params_ref[0]
    b_eff = params_ref[1]

    # sigmoid(slope * (conv_w * add_weight + conv_b))   (1x1 conv folded)
    prob = jax.nn.sigmoid(a_eff * aw_ref[...] + b_eff)

    # global mean + sparsity renormalisation
    xbar = jnp.mean(prob)
    r = sparsity / xbar
    beta = (1.0 - sparsity) / jnp.maximum(1.0 - xbar, 1e-12)  # NaN guard
    le = (r <= 1.0).astype(jnp.float32)
    prob = le * prob * r + (1.0 - le) * (1.0 - (1.0 - prob) * beta)

    thresh = thresh_ref[...]
    if option:
        out_ref[...] = jax.nn.sigmoid(sample_slope * (prob - thresh))
    else:
        out_ref[...] = (prob > thresh).astype(jnp.float32)


# -----------------------------------------------------------------------------
# Wrapper
# -----------------------------------------------------------------------------
class MemcLoupePallas:
    """JAX/Pallas re-implementation of Memc_LOUPE (forward / calculate_Mask)."""

    def __init__(self, input_shape, slope, sample_slope, sparsity, key):
        self.input_shape = tuple(input_shape)          # (1, 1, 256, 64)
        self.slope = float(slope)
        self.sample_slope = float(sample_slope)
        self.sparsity = float(sparsity)

        k_aw, k_w, k_b = jax.random.split(key, 3)

        # add_weight = -log(1/u - 1) / slope, u ~ U(0, 1)
        u = jax.random.uniform(k_aw, self.input_shape, dtype=jnp.float32,
                               minval=1e-6, maxval=1.0 - 1e-6)
        self.add_weight = -jnp.log(1.0 / u - 1.0) / self.slope

        # Conv2d(1, 1, kernel_size=1): one scalar weight, one scalar bias.
        conv_w = jax.random.uniform(k_w, (), dtype=jnp.float32,
                                    minval=-1.0, maxval=1.0)
        conv_b = jax.random.uniform(k_b, (), dtype=jnp.float32,
                                    minval=-1.0, maxval=1.0)
        self.conv_params = jnp.stack([conv_w, conv_b]).astype(jnp.float32)

    def calculate_mask(self, kspace_mc, rng_key, option=True,
                       return_thresh=False):
        assert self.sparsity == 0.6
        B, C, H, W = kspace_mc.shape
        assert B == 1 and C == 1 and H == 256 and W == 64

        # Lane-dense view: (1,1,256,64) -> (128,128).  Contiguous reshape; all
        # ops are elementwise + one global mean, so this is semantically free
        # and gives full f32 vregs plus unmasked vector stores.
        HL, WL = 128, 128
        aw = self.add_weight.reshape(HL, WL)

        # Threshold uniforms (same role as torch.rand in the reference module).
        thresh = jax.random.uniform(rng_key, (HL, WL), dtype=jnp.float32)

        # Fold the 1x1-conv affine and `slope` into a single scale/bias.
        params = jnp.stack([self.slope * self.conv_params[0],
                            self.slope * self.conv_params[1]]
                           ).astype(jnp.float32)

        kernel = functools.partial(_loupe_kernel,
                                   sample_slope=self.sample_slope,
                                   sparsity=self.sparsity,
                                   option=bool(option))

        vmem_spec = pl.BlockSpec((HL, WL), lambda: (0, 0))
        out = pl.pallas_call(
            kernel,
            out_shape=jax.ShapeDtypeStruct((HL, WL), jnp.float32),
            in_specs=[
                pl.BlockSpec(memory_space=pltpu.MemorySpace.SMEM),  # scale/bias
                vmem_spec,                                          # add_weight
                vmem_spec,                                          # thresholds
            ],
            out_specs=vmem_spec,
        )(params, aw, thresh)

        out = out.reshape(B, C, H, W)
        if return_thresh:
            return out, thresh.reshape(H, W)
        return out

    def forward(self, mask, method, rng_key, option=True):
        B, C, H, W = mask.shape
        if method == 'undermask':
            assert H == 256 and W == 232
        else:
            assert H == 256 and W == 64
        return self.calculate_mask(mask, rng_key, option=option)


# -----------------------------------------------------------------------------
# Pure-JAX reference (consumes the same thresholds as the kernel)
# -----------------------------------------------------------------------------
def _reference(module: MemcLoupePallas, thresh2d, option=True):
    aw = module.add_weight.reshape(256, 64)
    a_eff = module.slope * module.conv_params[0]
    b_eff = module.slope * module.conv_params[1]
    prob = jax.nn.sigmoid(a_eff * aw + b_eff)
    xbar = jnp.mean(prob)
    r = module.sparsity / xbar
    beta = (1.0 - module.sparsity) / jnp.maximum(1.0 - xbar, 1e-12)
    le = (r <= 1.0).astype(jnp.float32)
    prob = le * prob * r + (1.0 - le) * (1.0 - (1.0 - prob) * beta)
    thresh = thresh2d.reshape(256, 64)
    if option:
        return jax.nn.sigmoid(module.sample_slope * (prob - thresh))
    return (prob > thresh).astype(jnp.float32)


# -----------------------------------------------------------------------------
# Main
# -----------------------------------------------------------------------------
if __name__ == "__main__":
    key = jax.random.PRNGKey(0)
    k_params, k_mask, k_thresh = jax.random.split(key, 3)

    # Shapes implied by the module's forward (method != 'undermask'):
    # mask / add_weight are (1, 1, 256, 64).
    input_shape = (1, 1, 256, 64)
    module = MemcLoupePallas(
        input_shape=input_shape,
        slope=5.0,
        sample_slope=200.0,
        sparsity=0.6,
        key=k_params,
    )

    mask = jax.random.normal(k_mask, input_shape, dtype=jnp.float32)

    # Production path: soft (differentiable) mask.
    out = module.forward(mask, method='kspace', rng_key=k_thresh, option=True)
    out = jax.block_until_ready(out)
    assert out.shape == input_shape
    assert out.dtype == jnp.float32
    assert bool(jnp.all(jnp.isfinite(out)))
    assert bool(jnp.all(out >= 0.0)) and bool(jnp.all(out <= 1.0))

    # Cross-check soft path against a pure-JAX reference with the same
    # thresholds.
    out_dbg, thresh = module.calculate_mask(mask, rng_key=k_thresh,
                                            option=True, return_thresh=True)
    out_dbg = jax.block_until_ready(out_dbg)
    ref = _reference(module, thresh, option=True).reshape(input_shape)
    assert bool(jnp.allclose(out_dbg, ref, atol=1e-5, rtol=1e-5))

    # Hard-threshold path (option=False) of the original module.
    out_hard, thresh_h = module.calculate_mask(mask, rng_key=k_thresh,
                                               option=False,
                                               return_thresh=True)
    out_hard = jax.block_until_ready(out_hard)
    ref_hard = _reference(module, thresh_h, option=False).reshape(input_shape)
    assert bool(jnp.all(out_hard == ref_hard))
    assert bool(jnp.all((out_hard == 0.0) | (out_hard == 1.0)))

    print("KERNEL_OK")
</pallas_src>

<mosaic_0001>
module attributes {stable_mosaic.version = 11 : i64} {
  func.func @_loupe_kernel(%arg0: memref<2xf32, #tpu.memory_space<smem>>, %arg1: memref<128x128xf32, #tpu.memory_space<vmem>>, %arg2: memref<128x128xf32, #tpu.memory_space<vmem>>, %arg3: memref<128x128xf32, #tpu.memory_space<vmem>>) attributes {dimension_semantics = [], scalar_prefetch = 0 : i64, scratch_operands = 0 : i64, tpu.core_type = #tpu.core_type<tc>} {
    %c0 = arith.constant 0 : index
    %0 = memref.load %arg0[%c0] : memref<2xf32, #tpu.memory_space<smem>>
    %c1 = arith.constant 1 : index
    %1 = memref.load %arg0[%c1] : memref<2xf32, #tpu.memory_space<smem>>
    %c0_0 = arith.constant 0 : index
    %c0_1 = arith.constant 0 : index
    %2 = vector.load %arg1[%c0_0, %c0_1] : memref<128x128xf32, #tpu.memory_space<vmem>>, vector<128x128xf32>
    %3 = vector.broadcast %0 : f32 to vector<128x128xf32>
    %4 = arith.mulf %3, %2 : vector<128x128xf32>
    %5 = vector.broadcast %1 : f32 to vector<128x128xf32>
    %6 = arith.addf %4, %5 : vector<128x128xf32>
    %7 = arith.negf %6 : vector<128x128xf32>
    %8 = math.exp %7 : vector<128x128xf32>
    %cst = arith.constant 1.000000e+00 : f32
    %9 = vector.broadcast %cst : f32 to vector<128x128xf32>
    %10 = arith.addf %9, %8 : vector<128x128xf32>
    %11 = arith.divf %9, %10 : vector<128x128xf32>
    %12 = vector.shape_cast %11 : vector<128x128xf32> to vector<1x128x128xf32>
    %cst_2 = arith.constant dense<0.000000e+00> : vector<1xf32>
    %13 = vector.multi_reduction <add>, %12, %cst_2 [1, 2] : vector<1x128x128xf32> to vector<1xf32>
    %14 = vector.shape_cast %13 : vector<1xf32> to vector<1x1x1xf32>
    %15 = vector.extract %14[0, 0, 0] : f32 from vector<1x1x1xf32>
    %cst_3 = arith.constant 1.638400e+04 : f32
    %16 = arith.divf %15, %cst_3 : f32
    %cst_4 = arith.constant 6.000000e-01 : f32
    %17 = arith.divf %cst_4, %16 : f32
    %cst_5 = arith.constant 1.000000e+00 : f32
    %18 = arith.subf %cst_5, %16 : f32
    %cst_6 = arith.constant 9.99999996E-13 : f32
    %19 = arith.maximumf %18, %cst_6 : f32
    %cst_7 = arith.constant 4.000000e-01 : f32
    %20 = arith.divf %cst_7, %19 : f32
    %cst_8 = arith.constant 1.000000e+00 : f32
    %21 = arith.cmpf ole, %17, %cst_8 : f32
    %22 = arith.extui %21 : i1 to i32
    %23 = arith.sitofp %22 : i32 to f32
    %24 = vector.broadcast %23 : f32 to vector<128x128xf32>
    %25 = arith.mulf %24, %11 : vector<128x128xf32>
    %26 = vector.broadcast %17 : f32 to vector<128x128xf32>
    %27 = arith.mulf %25, %26 : vector<128x128xf32>
    %cst_9 = arith.constant 1.000000e+00 : f32
    %28 = arith.subf %cst_9, %23 : f32
    %cst_10 = arith.constant 1.000000e+00 : f32
    %29 = vector.broadcast %cst_10 : f32 to vector<128x128xf32>
    %30 = arith.subf %29, %11 : vector<128x128xf32>
    %31 = vector.broadcast %20 : f32 to vector<128x128xf32>
    %32 = arith.mulf %30, %31 : vector<128x128xf32>
    %cst_11 = arith.constant 1.000000e+00 : f32
    %33 = vector.broadcast %cst_11 : f32 to vector<128x128xf32>
    %34 = arith.subf %33, %32 : vector<128x128xf32>
    %35 = vector.broadcast %28 : f32 to vector<128x128xf32>
    %36 = arith.mulf %35, %34 : vector<128x128xf32>
    %37 = arith.addf %27, %36 : vector<128x128xf32>
    %c0_12 = arith.constant 0 : index
    %c0_13 = arith.constant 0 : index
    %38 = vector.load %arg2[%c0_12, %c0_13] : memref<128x128xf32, #tpu.memory_space<vmem>>, vector<128x128xf32>
    %39 = arith.subf %37, %38 : vector<128x128xf32>
    %cst_14 = arith.constant 2.000000e+02 : f32
    %40 = vector.broadcast %cst_14 : f32 to vector<128x128xf32>
    %41 = arith.mulf %40, %39 : vector<128x128xf32>
    %42 = arith.negf %41 : vector<128x128xf32>
    %43 = math.exp %42 : vector<128x128xf32>
    %cst_15 = arith.constant 1.000000e+00 : f32
    %44 = vector.broadcast %cst_15 : f32 to vector<128x128xf32>
    %45 = arith.addf %44, %43 : vector<128x128xf32>
    %46 = arith.divf %44, %45 : vector<128x128xf32>
    %c0_16 = arith.constant 0 : index
    %c0_17 = arith.constant 0 : index
    %47 = vector.load %arg3[%c0_16, %c0_17] : memref<128x128xf32, #tpu.memory_space<vmem>>, vector<128x128xf32>
    tpu.vector_store %arg3[%c0_16, %c0_17], %46 {strides = array<i32>} : memref<128x128xf32, #tpu.memory_space<vmem>>, vector<128x128xf32>,
    return
  }
}

</mosaic_0001>

<llo_original>
// kernel: tpu_custom_call.1
$region0: #{tpu_custom_call.1}
  #allocation0 [shape = 'u32[]', space=smem, size = 0x4, offset = 0x4, fixed_abs, tag = 'smem constant byte address 0x4 - core index']
  #allocation1 [shape = 'u32[144,128]{1,0:T(1,128)}', space=vmem, size = 0x12000, scoped, tag = 'internal scratch']
  %s0 = inlined_call_operand.hbm [shape: f32[2], index: 0, kind: input, shape index: {}]
  %s1 = inlined_call_operand.hbm [shape: f32[128,128], index: 1, kind: input, shape index: {}]
  %s2 = inlined_call_operand.hbm [shape: f32[128,128], index: 2, kind: input, shape index: {}]
  %s3 = inlined_call_operand.hbm [shape: f32[128,128], index: 3, kind: output, shape index: {}]
  %s4 = sld [smem:[#allocation0]]
  $region34: #{tpu_custom_call.1} parent=0
    _
  %s6 = ssub.s32 1, %s4
  %s7 = scalar_select 0, %s6, %s4
  $region1: #{tpu_custom_call.1} parent=0
    #allocation2 [shape = 'u8[512]{0}', space=smem, size = 0x200, scoped, tag = 'input window, operand 0, single buffered']
    #allocation3 [shape = 's32[1]{0}', space=sflag, size = 0x4, scoped, tag = 'scoped memory for tpu_custom_call.1']
    #allocation4 [shape = 's32[1]{0}', space=sflag, size = 0x4, scoped, tag = 'scoped memory for tpu_custom_call.1']
    #allocation5 [shape = 's32[1]{0}', space=sflag, size = 0x4, scoped, tag = 'scoped memory for tpu_custom_call.1']
    #allocation6 [shape = 'u8[65536]{0}', space=vmem, size = 0x10000, scoped, tag = 'input window, operand 1, single buffered']
    #allocation7 [shape = 'u8[65536]{0}', space=vmem, size = 0x10000, scoped, tag = 'input window, operand 2, single buffered']
    #allocation8 [shape = 's32[1]{0}', space=sflag, size = 0x4, scoped, tag = 'scoped memory for tpu_custom_call.1']
    #allocation9 [shape = 'u8[65536]{0}', space=vmem, size = 0x10000, scoped, tag = 'output window, operand 0, single buffered']
    %8 = vsyncpa [#allocation5], 0
    %9 = vsyncpa [#allocation3], 0
    %10 = vsyncpa [#allocation8], 0
    %11 = vsyncpa [#allocation4], 0
    // Predicated region
    $region2: #{tpu_custom_call.1} parent=1 // pred_check
      _
    $region3: #{tpu_custom_call.1} parent=1 // pred_check_branch
      %13 = sbr.rel (0) target = $region5
    $region4: #{tpu_custom_call.1} parent=1 // pred_region
      %s15 = ssub.s32 16, 16
      %16 = vsyncadd [#allocation5], %s15
      %19 = dma.hbm_to_smem %s0, 16, [#allocation2], [#allocation5]
    $region5: #{tpu_custom_call.1} parent=1 // pred_fallthru
      _
    // Predicated region
    $region6: #{tpu_custom_call.1} parent=1 // pred_check
      _
    $region7: #{tpu_custom_call.1} parent=1 // pred_check_branch
      %21 = sbr.rel (0) target = $region9
    $region8: #{tpu_custom_call.1} parent=1 // pred_region
      %s23 = ssub.s32 2048, 2048
      %24 = vsyncadd [#allocation3], %s23
      %s25 = sshll.u32 [#allocation6], 4
      %s26 = int_to_ptr.vmem [resolvable:$true] %s25
      %31 = dma.hbm_to_vmem [thread:$0]  %s1, 2048, %s26, [#allocation3], 128, 128, 8
    $region9: #{tpu_custom_call.1} parent=1 // pred_fallthru
      _
    // Predicated region
    $region10: #{tpu_custom_call.1} parent=1 // pred_check
      _
    $region11: #{tpu_custom_call.1} parent=1 // pred_check_branch
      %33 = sbr.rel (0) target = $region13
    $region12: #{tpu_custom_call.1} parent=1 // pred_region
      %s35 = ssub.s32 2048, 2048
      %36 = vsyncadd [#allocation8], %s35
      %s37 = sshll.u32 [#allocation7], 4
      %s38 = int_to_ptr.vmem [resolvable:$true] %s37
      %43 = dma.hbm_to_vmem [thread:$0]  %s2, 2048, %s38, [#allocation8], 128, 128, 8
    $region13: #{tpu_custom_call.1} parent=1 // pred_fallthru
      _
    // Predicated region
    $region14: #{tpu_custom_call.1} parent=1 // pred_check
      _
    $region15: #{tpu_custom_call.1} parent=1 // pred_check_branch
      %45 = sbr.rel (0) target = $region17
    $region16: #{tpu_custom_call.1} parent=1 // pred_region
      %46 = dma.done [#allocation5], 16
    $region17: #{tpu_custom_call.1} parent=1 // pred_fallthru
      _
    // Predicated region
    $region18: #{tpu_custom_call.1} parent=1 // pred_check
      _
    $region19: #{tpu_custom_call.1} parent=1 // pred_check_branch
      %48 = sbr.rel (0) target = $region21
    $region20: #{tpu_custom_call.1} parent=1 // pred_region
      %49 = dma.done [#allocation3], 2048
    $region21: #{tpu_custom_call.1} parent=1 // pred_fallthru
      _
    // Predicated region
    $region22: #{tpu_custom_call.1} parent=1 // pred_check
      _
    $region23: #{tpu_custom_call.1} parent=1 // pred_check_branch
      %51 = sbr.rel (0) target = $region25
    $region24: #{tpu_custom_call.1} parent=1 // pred_region
      %52 = dma.done [#allocation8], 2048
    $region25: #{tpu_custom_call.1} parent=1 // pred_fallthru
      _
    %53 = sfence
    %s54 = sld [smem:[#allocation2]]
    %s55 = sld [smem:[#allocation2 + $0x1]]
    %v56 = vld [vmem:[#allocation6] sm:$0xff]
    %v57 = vld [vmem:[#allocation6 + $0x8] sm:$0xff]
    %v58 = vld [vmem:[#allocation6 + $0x10] sm:$0xff]
    %v59 = vld [vmem:[#allocation6 + $0x18] sm:$0xff]
    %v60 = vld [vmem:[#allocation6 + $0x20] sm:$0xff]
    %v61 = vld [vmem:[#allocation6 + $0x28] sm:$0xff]
    %v62 = vld [vmem:[#allocation6 + $0x30] sm:$0xff]
    %v63 = vld [vmem:[#allocation6 + $0x38] sm:$0xff]
    %v64 = vld [vmem:[#allocation6 + $0x40] sm:$0xff]
    %v65 = vld [vmem:[#allocation6 + $0x48] sm:$0xff]
    %v66 = vld [vmem:[#allocation6 + $0x50] sm:$0xff]
    %v67 = vld [vmem:[#allocation6 + $0x58] sm:$0xff]
    %v68 = vld [vmem:[#allocation6 + $0x60] sm:$0xff]
    %v69 = vld [vmem:[#allocation6 + $0x68] sm:$0xff]
    %v70 = vld [vmem:[#allocation6 + $0x70] sm:$0xff]
    %v71 = vld [vmem:[#allocation6 + $0x78] sm:$0xff]
    %v72 = vstv %s54
    %v73 = vmul.f32 %v72, %v56
    %v74 = vmul.f32 %v72, %v57
    %v75 = vmul.f32 %v72, %v58
    %v76 = vmul.f32 %v72, %v59
    %v77 = vmul.f32 %v72, %v60
    %v78 = vmul.f32 %v72, %v61
    %v79 = vmul.f32 %v72, %v62
    %v80 = vmul.f32 %v72, %v63
    %v81 = vmul.f32 %v72, %v64
    %v82 = vmul.f32 %v72, %v65
    %v83 = vmul.f32 %v72, %v66
    %v84 = vmul.f32 %v72, %v67
    %v85 = vmul.f32 %v72, %v68
    %v86 = vmul.f32 %v72, %v69
    %v87 = vmul.f32 %v72, %v70
    %v88 = vmul.f32 %v72, %v71
    %v89 = vstv %s55
    %v90 = vadd.f32 %v73, %v89
    %v91 = vadd.f32 %v74, %v89
    %v92 = vadd.f32 %v75, %v89
    %v93 = vadd.f32 %v76, %v89
    %v94 = vadd.f32 %v77, %v89
    %v95 = vadd.f32 %v78, %v89
    %v96 = vadd.f32 %v79, %v89
    %v97 = vadd.f32 %v80, %v89
    %v98 = vadd.f32 %v81, %v89
    %v99 = vadd.f32 %v82, %v89
    %v100 = vadd.f32 %v83, %v89
    %v101 = vadd.f32 %v84, %v89
    %v102 = vadd.f32 %v85, %v89
    %v103 = vadd.f32 %v86, %v89
    %v104 = vadd.f32 %v87, %v89
    %v105 = vadd.f32 %v88, %v89
    %v106 = vxor.u32 %v90, 2147483648
    %v107 = vxor.u32 %v91, 2147483648
    %v108 = vxor.u32 %v92, 2147483648
    %v109 = vxor.u32 %v93, 2147483648
    %v110 = vxor.u32 %v94, 2147483648
    %v111 = vxor.u32 %v95, 2147483648
    %v112 = vxor.u32 %v96, 2147483648
    %v113 = vxor.u32 %v97, 2147483648
    %v114 = vxor.u32 %v98, 2147483648
    %v115 = vxor.u32 %v99, 2147483648
    %v116 = vxor.u32 %v100, 2147483648
    %v117 = vxor.u32 %v101, 2147483648
    %v118 = vxor.u32 %v102, 2147483648
    %v119 = vxor.u32 %v103, 2147483648
    %v120 = vxor.u32 %v104, 2147483648
    %v121 = vxor.u32 %v105, 2147483648
    %v122 = vmul.f32 %v106, 1.442695
    %v123 = vpow.pop %v122
    %v124 = vmul.f32 %v107, 1.442695
    %v125 = vpow.pop %v124
    %v126 = vmul.f32 %v108, 1.442695
    %v127 = vpow.pop %v126
    %v128 = vmul.f32 %v109, 1.442695
    %v129 = vpow.pop %v128
    %v130 = vmul.f32 %v110, 1.442695
    %v131 = vpow.pop %v130
    %v132 = vmul.f32 %v111, 1.442695
    %v133 = vpow.pop %v132
    %v134 = vmul.f32 %v112, 1.442695
    %v135 = vpow.pop %v134
    %v136 = vmul.f32 %v113, 1.442695
    %v137 = vpow.pop %v136
    %v138 = vmul.f32 %v114, 1.442695
    %v139 = vpow.pop %v138
    %v140 = vmul.f32 %v115, 1.442695
    %v141 = vpow.pop %v140
    %v142 = vmul.f32 %v116, 1.442695
    %v143 = vpow.pop %v142
    %v144 = vmul.f32 %v117, 1.442695
    %v145 = vpow.pop %v144
    %v146 = vmul.f32 %v118, 1.442695
    %v147 = vpow.pop %v146
    %v148 = vmul.f32 %v119, 1.442695
    %v149 = vpow.pop %v148
    %v150 = vmul.f32 %v120, 1.442695
    %v151 = vpow.pop %v150
    %v152 = vmul.f32 %v121, 1.442695
    %v153 = vpow.pop %v152
    %v154 = vadd.f32 %v123, 1.0
    %v155 = vadd.f32 %v125, 1.0
    %v156 = vadd.f32 %v127, 1.0
    %v157 = vadd.f32 %v129, 1.0
    %v158 = vadd.f32 %v131, 1.0
    %v159 = vadd.f32 %v133, 1.0
    %v160 = vadd.f32 %v135, 1.0
    %v161 = vadd.f32 %v137, 1.0
    %v162 = vadd.f32 %v139, 1.0
    %v163 = vadd.f32 %v141, 1.0
    %v164 = vadd.f32 %v143, 1.0
    %v165 = vadd.f32 %v145, 1.0
    %v166 = vadd.f32 %v147, 1.0
    %v167 = vadd.f32 %v149, 1.0
    %v168 = vadd.f32 %v151, 1.0
    %v169 = vadd.f32 %v153, 1.0
    %v170 = vrcp.pop %v154
    %v171 = vmul.f32 1.0, %v170
    %v172 = vrcp.pop %v155
    %v173 = vmul.f32 1.0, %v172
    %v174 = vrcp.pop %v156
    %v175 = vmul.f32 1.0, %v174
    %v176 = vrcp.pop %v157
    %v177 = vmul.f32 1.0, %v176
    %v178 = vrcp.pop %v158
    %v179 = vmul.f32 1.0, %v178
    %v180 = vrcp.pop %v159
    %v181 = vmul.f32 1.0, %v180
    %v182 = vrcp.pop %v160
    %v183 = vmul.f32 1.0, %v182
    %v184 = vrcp.pop %v161
    %v185 = vmul.f32 1.0, %v184
    %v186 = vrcp.pop %v162
    %v187 = vmul.f32 1.0, %v186
    %v188 = vrcp.pop %v163
    %v189 = vmul.f32 1.0, %v188
    %v190 = vrcp.pop %v164
    %v191 = vmul.f32 1.0, %v190
    %v192 = vrcp.pop %v165
    %v193 = vmul.f32 1.0, %v192
    %v194 = vrcp.pop %v166
    %v195 = vmul.f32 1.0, %v194
    %v196 = vrcp.pop %v167
    %v197 = vmul.f32 1.0, %v196
    %v198 = vrcp.pop %v168
    %v199 = vmul.f32 1.0, %v198
    %v200 = vrcp.pop %v169
    %v201 = vmul.f32 1.0, %v200
    %v202 = vadd.f32 %v171, %v173
    %v203 = vadd.f32 %v202, %v175
    %v204 = vadd.f32 %v203, %v177
    %v205 = vadd.f32 %v204, %v179
    %v206 = vadd.f32 %v205, %v181
    %v207 = vadd.f32 %v206, %v183
    %v208 = vadd.f32 %v207, %v185
    %v209 = vadd.f32 %v208, %v187
    %v210 = vadd.f32 %v209, %v189
    %v211 = vadd.f32 %v210, %v191
    %v212 = vadd.f32 %v211, %v193
    %v213 = vadd.f32 %v212, %v195
    %v214 = vadd.f32 %v213, %v197
    %v215 = vadd.f32 %v214, %v199
    %v216 = vadd.f32 %v215, %v201
    %217 = vadd.xlane.f32.xlu0 %v216
    %v218 = vpop.xlane.xlu0 %217
    %v219 = vrot.slane %v218, 4
    %v220 = vadd.f32 %v218, %v219
    %v221 = vrot.slane %v220, 2
    %v222 = vadd.f32 %v220, %v221
    %v223 = vrot.slane %v222, 1
    %v224 = vadd.f32 %v222, %v223
    %s225 = vtos %v224
    %v226 = vrcp.pop 16384.0
    %s227 = vtos %v226
    %s228 = smul.f32 %s225, %s227
    %v229 = vstv %s228
    %v230 = vrcp.pop %v229
    %s231 = vtos %v230
    %s232 = smul.f32 0.6, %s231
    %s233 = ssub.f32 1.0, %s228
    %s234 = smax.f32 %s233, 1e-12
    %v235 = vstv %s234
    %v236 = vrcp.pop %v235
    %s237 = vtos %v236
    %s238 = smul.f32 0.4, %s237
    %p239 = scmp.le.f32.partialorder %s232, 1.0
    %s240 = scalar_select %p239, 1, 0
    %s241 = scvt.s32.f32 %s240
    %v242 = vstv %s241
    %v243 = vmul.f32 %v242, %v171
    %v244 = vmul.f32 %v242, %v173
    %v245 = vmul.f32 %v242, %v175
    %v246 = vmul.f32 %v242, %v177
    %v247 = vmul.f32 %v242, %v179
    %v248 = vmul.f32 %v242, %v181
    %v249 = vmul.f32 %v242, %v183
    %v250 = vmul.f32 %v242, %v185
    %v251 = vmul.f32 %v242, %v187
    %v252 = vmul.f32 %v242, %v189
    %v253 = vmul.f32 %v242, %v191
    %v254 = vmul.f32 %v242, %v193
    %v255 = vmul.f32 %v242, %v195
    %v256 = vmul.f32 %v242, %v197
    %v257 = vmul.f32 %v242, %v199
    %v258 = vmul.f32 %v242, %v201
    %v259 = vstv %s232
    %v260 = vmul.f32 %v243, %v259
    %v261 = vmul.f32 %v244, %v259
    %v262 = vmul.f32 %v245, %v259
    %v263 = vmul.f32 %v246, %v259
    %v264 = vmul.f32 %v247, %v259
    %v265 = vmul.f32 %v248, %v259
    %v266 = vmul.f32 %v249, %v259
    %v267 = vmul.f32 %v250, %v259
    %v268 = vmul.f32 %v251, %v259
    %v269 = vmul.f32 %v252, %v259
    %v270 = vmul.f32 %v253, %v259
    %v271 = vmul.f32 %v254, %v259
    %v272 = vmul.f32 %v255, %v259
    %v273 = vmul.f32 %v256, %v259
    %v274 = vmul.f32 %v257, %v259
    %v275 = vmul.f32 %v258, %v259
    %s276 = ssub.f32 1.0, %s241
    %v277 = vsub.f32 1.0, %v171
    %v278 = vsub.f32 1.0, %v173
    %v279 = vsub.f32 1.0, %v175
    %v280 = vsub.f32 1.0, %v177
    %v281 = vsub.f32 1.0, %v179
    %v282 = vsub.f32 1.0, %v181
    %v283 = vsub.f32 1.0, %v183
    %v284 = vsub.f32 1.0, %v185
    %v285 = vsub.f32 1.0, %v187
    %v286 = vsub.f32 1.0, %v189
    %v287 = vsub.f32 1.0, %v191
    %v288 = vsub.f32 1.0, %v193
    %v289 = vsub.f32 1.0, %v195
    %v290 = vsub.f32 1.0, %v197
    %v291 = vsub.f32 1.0, %v199
    %v292 = vsub.f32 1.0, %v201
    %v293 = vstv %s238
    %v294 = vmul.f32 %v277, %v293
    %v295 = vmul.f32 %v278, %v293
    %v296 = vmul.f32 %v279, %v293
    %v297 = vmul.f32 %v280, %v293
    %v298 = vmul.f32 %v281, %v293
    %v299 = vmul.f32 %v282, %v293
    %v300 = vmul.f32 %v283, %v293
    %v301 = vmul.f32 %v284, %v293
    %v302 = vmul.f32 %v285, %v293
    %v303 = vmul.f32 %v286, %v293
    %v304 = vmul.f32 %v287, %v293
    %v305 = vmul.f32 %v288, %v293
    %v306 = vmul.f32 %v289, %v293
    %v307 = vmul.f32 %v290, %v293
    %v308 = vmul.f32 %v291, %v293
    %v309 = vmul.f32 %v292, %v293
    %v310 = vsub.f32 1.0, %v294
    %v311 = vsub.f32 1.0, %v295
    %v312 = vsub.f32 1.0, %v296
    %v313 = vsub.f32 1.0, %v297
    %v314 = vsub.f32 1.0, %v298
    %v315 = vsub.f32 1.0, %v299
    %v316 = vsub.f32 1.0, %v300
    %v317 = vsub.f32 1.0, %v301
    %v318 = vsub.f32 1.0, %v302
    %v319 = vsub.f32 1.0, %v303
    %v320 = vsub.f32 1.0, %v304
    %v321 = vsub.f32 1.0, %v305
    %v322 = vsub.f32 1.0, %v306
    %v323 = vsub.f32 1.0, %v307
    %v324 = vsub.f32 1.0, %v308
    %v325 = vsub.f32 1.0, %v309
    %v326 = vstv %s276
    %v327 = vmul.f32 %v326, %v310
    %v328 = vmul.f32 %v326, %v311
    %v329 = vmul.f32 %v326, %v312
    %v330 = vmul.f32 %v326, %v313
    %v331 = vmul.f32 %v326, %v314
    %v332 = vmul.f32 %v326, %v315
    %v333 = vmul.f32 %v326, %v316
    %v334 = vmul.f32 %v326, %v317
    %v335 = vmul.f32 %v326, %v318
    %v336 = vmul.f32 %v326, %v319
    %v337 = vmul.f32 %v326, %v320
    %v338 = vmul.f32 %v326, %v321
    %v339 = vmul.f32 %v326, %v322
    %v340 = vmul.f32 %v326, %v323
    %v341 = vmul.f32 %v326, %v324
    %v342 = vmul.f32 %v326, %v325
    %v343 = vadd.f32 %v260, %v327
    %v344 = vadd.f32 %v261, %v328
    %v345 = vadd.f32 %v262, %v329
    %v346 = vadd.f32 %v263, %v330
    %v347 = vadd.f32 %v264, %v331
    %v348 = vadd.f32 %v265, %v332
    %v349 = vadd.f32 %v266, %v333
    %v350 = vadd.f32 %v267, %v334
    %v351 = vadd.f32 %v268, %v335
    %v352 = vadd.f32 %v269, %v336
    %v353 = vadd.f32 %v270, %v337
    %v354 = vadd.f32 %v271, %v338
    %v355 = vadd.f32 %v272, %v339
    %v356 = vadd.f32 %v273, %v340
    %v357 = vadd.f32 %v274, %v341
    %v358 = vadd.f32 %v275, %v342
    %v359 = vld [vmem:[#allocation7] sm:$0xff]
    %v360 = vld [vmem:[#allocation7 + $0x8] sm:$0xff]
    %v361 = vld [vmem:[#allocation7 + $0x10] sm:$0xff]
    %v362 = vld [vmem:[#allocation7 + $0x18] sm:$0xff]
    %v363 = vld [vmem:[#allocation7 + $0x20] sm:$0xff]
    %v364 = vld [vmem:[#allocation7 + $0x28] sm:$0xff]
    %v365 = vld [vmem:[#allocation7 + $0x30] sm:$0xff]
    %v366 = vld [vmem:[#allocation7 + $0x38] sm:$0xff]
    %v367 = vld [vmem:[#allocation7 + $0x40] sm:$0xff]
    %v368 = vld [vmem:[#allocation7 + $0x48] sm:$0xff]
    %v369 = vld [vmem:[#allocation7 + $0x50] sm:$0xff]
    %v370 = vld [vmem:[#allocation7 + $0x58] sm:$0xff]
    %v371 = vld [vmem:[#allocation7 + $0x60] sm:$0xff]
    %v372 = vld [vmem:[#allocation7 + $0x68] sm:$0xff]
    %v373 = vld [vmem:[#allocation7 + $0x70] sm:$0xff]
    %v374 = vld [vmem:[#allocation7 + $0x78] sm:$0xff]
    %v375 = vsub.f32 %v343, %v359
    %v376 = vsub.f32 %v344, %v360
    %v377 = vsub.f32 %v345, %v361
    %v378 = vsub.f32 %v346, %v362
    %v379 = vsub.f32 %v347, %v363
    %v380 = vsub.f32 %v348, %v364
    %v381 = vsub.f32 %v349, %v365
    %v382 = vsub.f32 %v350, %v366
    %v383 = vsub.f32 %v351, %v367
    %v384 = vsub.f32 %v352, %v368
    %v385 = vsub.f32 %v353, %v369
    %v386 = vsub.f32 %v354, %v370
    %v387 = vsub.f32 %v355, %v371
    %v388 = vsub.f32 %v356, %v372
    %v389 = vsub.f32 %v357, %v373
    %v390 = vsub.f32 %v358, %v374
    %v391 = vmul.f32 %v375, 200.0
    %v392 = vmul.f32 %v376, 200.0
    %v393 = vmul.f32 %v377, 200.0
    %v394 = vmul.f32 %v378, 200.0
    %v395 = vmul.f32 %v379, 200.0
    %v396 = vmul.f32 %v380, 200.0
    %v397 = vmul.f32 %v381, 200.0
    %v398 = vmul.f32 %v382, 200.0
    %v399 = vmul.f32 %v383, 200.0
    %v400 = vmul.f32 %v384, 200.0
    %v401 = vmul.f32 %v385, 200.0
    %v402 = vmul.f32 %v386, 200.0
    %v403 = vmul.f32 %v387, 200.0
    %v404 = vmul.f32 %v388, 200.0
    %v405 = vmul.f32 %v389, 200.0
    %v406 = vmul.f32 %v390, 200.0
    %v407 = vxor.u32 %v391, 2147483648
    %v408 = vxor.u32 %v392, 2147483648
    %v409 = vxor.u32 %v393, 2147483648
    %v410 = vxor.u32 %v394, 2147483648
    %v411 = vxor.u32 %v395, 2147483648
    %v412 = vxor.u32 %v396, 2147483648
    %v413 = vxor.u32 %v397, 2147483648
    %v414 = vxor.u32 %v398, 2147483648
    %v415 = vxor.u32 %v399, 2147483648
    %v416 = vxor.u32 %v400, 2147483648
    %v417 = vxor.u32 %v401, 2147483648
    %v418 = vxor.u32 %v402, 2147483648
    %v419 = vxor.u32 %v403, 2147483648
    %v420 = vxor.u32 %v404, 2147483648
    %v421 = vxor.u32 %v405, 2147483648
    %v422 = vxor.u32 %v406, 2147483648
    %v423 = vmul.f32 %v407, 1.442695
    %v424 = vpow.pop %v423
    %v425 = vmul.f32 %v408, 1.442695
    %v426 = vpow.pop %v425
    %v427 = vmul.f32 %v409, 1.442695
    %v428 = vpow.pop %v427
    %v429 = vmul.f32 %v410, 1.442695
    %v430 = vpow.pop %v429
    %v431 = vmul.f32 %v411, 1.442695
    %v432 = vpow.pop %v431
    %v433 = vmul.f32 %v412, 1.442695
    %v434 = vpow.pop %v433
    %v435 = vmul.f32 %v413, 1.442695
    %v436 = vpow.pop %v435
    %v437 = vmul.f32 %v414, 1.442695
    %v438 = vpow.pop %v437
    %v439 = vmul.f32 %v415, 1.442695
    %v440 = vpow.pop %v439
    %v441 = vmul.f32 %v416, 1.442695
    %v442 = vpow.pop %v441
    %v443 = vmul.f32 %v417, 1.442695
    %v444 = vpow.pop %v443
    %v445 = vmul.f32 %v418, 1.442695
    %v446 = vpow.pop %v445
    %v447 = vmul.f32 %v419, 1.442695
    %v448 = vpow.pop %v447
    %v449 = vmul.f32 %v420, 1.442695
    %v450 = vpow.pop %v449
    %v451 = vmul.f32 %v421, 1.442695
    %v452 = vpow.pop %v451
    %v453 = vmul.f32 %v422, 1.442695
    %v454 = vpow.pop %v453
    %v455 = vadd.f32 %v424, 1.0
    %v456 = vadd.f32 %v426, 1.0
    %v457 = vadd.f32 %v428, 1.0
    %v458 = vadd.f32 %v430, 1.0
    %v459 = vadd.f32 %v432, 1.0
    %v460 = vadd.f32 %v434, 1.0
    %v461 = vadd.f32 %v436, 1.0
    %v462 = vadd.f32 %v438, 1.0
    %v463 = vadd.f32 %v440, 1.0
    %v464 = vadd.f32 %v442, 1.0
    %v465 = vadd.f32 %v444, 1.0
    %v466 = vadd.f32 %v446, 1.0
    %v467 = vadd.f32 %v448, 1.0
    %v468 = vadd.f32 %v450, 1.0
    %v469 = vadd.f32 %v452, 1.0
    %v470 = vadd.f32 %v454, 1.0
    %v471 = vrcp.pop %v455
    %v472 = vmul.f32 1.0, %v471
    %v473 = vrcp.pop %v456
    %v474 = vmul.f32 1.0, %v473
    %v475 = vrcp.pop %v457
    %v476 = vmul.f32 1.0, %v475
    %v477 = vrcp.pop %v458
    %v478 = vmul.f32 1.0, %v477
    %v479 = vrcp.pop %v459
    %v480 = vmul.f32 1.0, %v479
    %v481 = vrcp.pop %v460
    %v482 = vmul.f32 1.0, %v481
    %v483 = vrcp.pop %v461
    %v484 = vmul.f32 1.0, %v483
    %v485 = vrcp.pop %v462
    %v486 = vmul.f32 1.0, %v485
    %v487 = vrcp.pop %v463
    %v488 = vmul.f32 1.0, %v487
    %v489 = vrcp.pop %v464
    %v490 = vmul.f32 1.0, %v489
    %v491 = vrcp.pop %v465
    %v492 = vmul.f32 1.0, %v491
    %v493 = vrcp.pop %v466
    %v494 = vmul.f32 1.0, %v493
    %v495 = vrcp.pop %v467
    %v496 = vmul.f32 1.0, %v495
    %v497 = vrcp.pop %v468
    %v498 = vmul.f32 1.0, %v497
    %v499 = vrcp.pop %v469
    %v500 = vmul.f32 1.0, %v499
    %v501 = vrcp.pop %v470
    %v502 = vmul.f32 1.0, %v501
    %503 = vst [vmem:[#allocation9] sm:$0xff] %v472
    %504 = vst [vmem:[#allocation9 + $0x8] sm:$0xff] %v474
    %505 = vst [vmem:[#allocation9 + $0x10] sm:$0xff] %v476
    %506 = vst [vmem:[#allocation9 + $0x18] sm:$0xff] %v478
    %507 = vst [vmem:[#allocation9 + $0x20] sm:$0xff] %v480
    %508 = vst [vmem:[#allocation9 + $0x28] sm:$0xff] %v482
    %509 = vst [vmem:[#allocation9 + $0x30] sm:$0xff] %v484
    %510 = vst [vmem:[#allocation9 + $0x38] sm:$0xff] %v486
    %511 = vst [vmem:[#allocation9 + $0x40] sm:$0xff] %v488
    %512 = vst [vmem:[#allocation9 + $0x48] sm:$0xff] %v490
    %513 = vst [vmem:[#allocation9 + $0x50] sm:$0xff] %v492
    %514 = vst [vmem:[#allocation9 + $0x58] sm:$0xff] %v494
    %515 = vst [vmem:[#allocation9 + $0x60] sm:$0xff] %v496
    %516 = vst [vmem:[#allocation9 + $0x68] sm:$0xff] %v498
    %517 = vst [vmem:[#allocation9 + $0x70] sm:$0xff] %v500
    %518 = vst [vmem:[#allocation9 + $0x78] sm:$0xff] %v502
    // Predicated region
    $region26: #{tpu_custom_call.1} parent=1 // pred_check
      _
    $region27: #{tpu_custom_call.1} parent=1 // pred_check_branch
      %520 = sbr.rel (0) target = $region29
    $region28: #{tpu_custom_call.1} parent=1 // pred_region
      %s522 = ssub.s32 2048, 2048
      %523 = vsyncadd [#allocation4], %s522
      %s524 = sshll.u32 [#allocation9], 4
      %s525 = int_to_ptr.vmem [resolvable:$true] %s524
      %530 = dma.vmem_to_hbm [thread:$0]  %s525, 2048, %s3, [#allocation4], 128, 128, 8
    $region29: #{tpu_custom_call.1} parent=1 // pred_fallthru
      _
    // Predicated region
    $region30: #{tpu_custom_call.1} parent=1 // pred_check
      _
    $region31: #{tpu_custom_call.1} parent=1 // pred_check_branch
      %532 = sbr.rel (0) target = $region33
    $region32: #{tpu_custom_call.1} parent=1 // pred_region
      %533 = dma.done [#allocation4], 2048
    $region33: #{tpu_custom_call.1} parent=1 // pred_fallthru
      _
    %534 = vsyncpa [#allocation3], 1
    %535 = vsyncpa [#allocation8], 1
    %536 = vsyncpa [#allocation4], 1
    %537 = vsyncpa [#allocation5], 1

</llo_original>
